<compile_context>
chip_gen: v5e
topology: v5e:2x2
jax: 0.10.0
libtpu: 0.0.40
codegen_flags: <defaults>
</compile_context>

<pallas_src>
import jax
import jax.numpy as jnp
from jax.experimental import pallas as pl
from jax.experimental.pallas import tpu as pltpu

HIDDEN = 64
FUSED = 2 * HIDDEN  # 128 -> matches the 128-lane vreg / a full 128-wide MXU tile


def _round_up(x, m):
    return ((x + m - 1) // m) * m


def _cdiv(a, b):
    return (a + b - 1) // b


# ----------------------------------------------------------------------------
# Pallas kernel: one fused pass over a (TILE_B, feat) batch tile
# ----------------------------------------------------------------------------
def _make_kernel(compute_dtype):
    cd = jnp.dtype(compute_dtype)

    def kernel(x_ref,                    # (TILE_B, feat)
               w1_ref, b1_ref,           # (feat, 128), (1, 128)
               w2_ref, b2_ref,           # (128, 128),  (1, 128)
               w3a_ref, b3a_ref,         # (128, dim_act), (1, dim_act)
               w3c_ref, b3c_ref,         # (128, 1),       (1, 1)
               mean_ref, value_ref):     # (TILE_B, dim_act), (TILE_B, 1)
        x = x_ref[...].astype(cd)
        h = jnp.dot(x, w1_ref[...], preferred_element_type=jnp.float32) + b1_ref[...]
        h = jnp.tanh(h.astype(cd))       # bf16 tanh rides the EUP bf16 path on v6e/v7x
        h = jnp.dot(h, w2_ref[...], preferred_element_type=jnp.float32) + b2_ref[...]
        h = jnp.tanh(h.astype(cd))
        mean = jnp.dot(h, w3a_ref[...], preferred_element_type=jnp.float32) + b3a_ref[...]
        value = jnp.dot(h, w3c_ref[...], preferred_element_type=jnp.float32) + b3c_ref[...]
        mean_ref[...] = mean.astype(mean_ref.dtype)
        value_ref[...] = value.astype(value_ref.dtype)

    return kernel


# ----------------------------------------------------------------------------
# Weight packing: block-diagonal fusion of actor + critic towers
# ----------------------------------------------------------------------------
def pack_params(params, dim_obs, dim_act, in_features=None, compute_dtype=jnp.float32):
    """Pack once, outside the kernel. compute_dtype=bf16 is recommended on v6e/v7x."""
    cd = jnp.dtype(compute_dtype)
    critic_in = params["cw1"].shape[0]          # dim_obs + 1 (append_time=True)
    feat = critic_in if in_features is None else in_features
    assert feat >= critic_in

    # Layer 1: actor fc1 with zero rows for the time feature (and any lane padding),
    # concatenated with critic fc1.
    w1 = jnp.zeros((feat, FUSED), jnp.float32)
    w1 = w1.at[:dim_obs, :HIDDEN].set(params["aw1"])
    w1 = w1.at[:critic_in, HIDDEN:].set(params["cw1"])
    b1 = jnp.concatenate([params["ab1"], params["cb1"]], axis=1)

    # Layer 2: block-diagonal.
    w2 = jnp.zeros((FUSED, FUSED), jnp.float32)
    w2 = w2.at[:HIDDEN, :HIDDEN].set(params["aw2"])
    w2 = w2.at[HIDDEN:, HIDDEN:].set(params["cw2"])
    b2 = jnp.concatenate([params["ab2"], params["cb2"]], axis=1)

    # Layer 3: two narrow lane-0-aligned heads with K padded to 128 by exact zeros,
    # so the kernel writes (B, dim_act) / (B, 1) directly (no 128-lane output slab).
    w3a = jnp.zeros((FUSED, dim_act), jnp.float32).at[:HIDDEN, :].set(params["aw3"])
    b3a = params["ab3"]
    w3c = jnp.zeros((FUSED, 1), jnp.float32).at[HIDDEN:, :].set(params["cw3"])
    b3c = params["cb3"]

    # Weights carry the compute dtype; biases stay f32 (added to the f32 accumulator).
    return (w1.astype(cd), b1, w2.astype(cd), b2,
            w3a.astype(cd), b3a, w3c.astype(cd), b3c)


# ----------------------------------------------------------------------------
# Wrapper
# ----------------------------------------------------------------------------
def actor_critic_forward(states, packed, *, dim_act, tile_b=4096, num_cores=2):
    """Fused actor/critic forward. Returns (action_mean (B,dim_act), critic_value (B,1)).

    NOTE: for the per-env-step B~8 use case, batch many steps into one call; at tiny B
    launch/DMA overhead dominates by 10-100x (the grid is a loop, one big call is cheap).
    """
    w1, b1, w2, b2, w3a, b3a, w3c, b3c = packed
    compute_dtype = w1.dtype            # kernel compute dtype follows the packed weights
    B, feat = states.shape
    assert feat == w1.shape[0], "states feature width must match packed W1"

    # ---- padding-aware batch tiling; force >=2 grid steps at large B (v7x megacore) ----
    min_steps = num_cores if B >= num_cores * 1024 else 1
    g = max(min_steps, _cdiv(B, tile_b))
    tile = _round_up(_cdiv(B, g), 8)            # pads at most 7 rows per step
    g = max(min_steps, _cdiv(B, tile))
    b_pad = g * tile
    if b_pad != B:
        states = jnp.pad(states, ((0, b_pad - B), (0, 0)))

    # ---- explicit scoped-VMEM budget (v5e default is only 16 MiB) ----
    lane = 128
    io_bytes = 2 * tile * lane * states.dtype.itemsize      # input, lane-padded, 2 bufs
    io_bytes += 2 * 2 * tile * lane * 4                     # two f32 outputs, 2 bufs each
    w_bytes = 2 * sum(int(a.size) * a.dtype.itemsize for a in packed)
    tmp_bytes = 6 * tile * lane * 4                         # in-kernel intermediates
    vmem_limit = int(min(max((io_bytes + w_bytes + tmp_bytes) * 5 // 4, 32 << 20), 64 << 20))

    const = lambda i: (0, 0)   # weights/biases (~0.2 MiB) resident across grid steps

    mean, value = pl.pallas_call(
        _make_kernel(compute_dtype),
        out_shape=(jax.ShapeDtypeStruct((b_pad, dim_act), jnp.float32),
                   jax.ShapeDtypeStruct((b_pad, 1), jnp.float32)),
        grid=(g,),
        in_specs=[pl.BlockSpec((tile, feat), lambda i: (i, 0))]
                + [pl.BlockSpec(a.shape, const) for a in packed],
        out_specs=(pl.BlockSpec((tile, dim_act), lambda i: (i, 0)),
                   pl.BlockSpec((tile, 1), lambda i: (i, 0))),
        compiler_params=pltpu.CompilerParams(
            dimension_semantics=("parallel",),   # shard batch steps across TCs on v7x
            vmem_limit_bytes=vmem_limit,
        ),
    )(states, *packed)

    if b_pad != B:                               # only tiny (B, dim_act)/(B,1) re-slices
        mean, value = mean[:B], value[:B]
    return mean, value


# ----------------------------------------------------------------------------
# Deterministic parameter construction (mirrors the PyTorch __init__ shapes).
# Orthogonal init with the given gain, biases zero (== ActorCritic.layer_norm).
# ----------------------------------------------------------------------------
def make_params(key, dim_obs, dim_act, init_std=1.0, append_time=True):
    ortho = jax.nn.initializers.orthogonal

    def linear(k, in_f, out_f, std):
        # PyTorch Linear weight is (out, in); store transposed (in, out) so x @ W + b.
        w = ortho(scale=std)(k, (out_f, in_f), jnp.float32).T
        b = jnp.zeros((1, out_f), jnp.float32)
        return w, b

    keys = jax.random.split(key, 6)
    critic_in = dim_obs + 1 if append_time else dim_obs

    aw1, ab1 = linear(keys[0], dim_obs, HIDDEN, 1.0)
    aw2, ab2 = linear(keys[1], HIDDEN, HIDDEN, 1.0)
    aw3, ab3 = linear(keys[2], HIDDEN, dim_act, 0.01)
    cw1, cb1 = linear(keys[3], critic_in, HIDDEN, 1.0)
    cw2, cb2 = linear(keys[4], HIDDEN, HIDDEN, 1.0)
    cw3, cb3 = linear(keys[5], HIDDEN, 1, 1.0)

    action_std = init_std * jnp.ones((1, dim_act), jnp.float32)

    return {
        "aw1": aw1, "ab1": ab1, "aw2": aw2, "ab2": ab2, "aw3": aw3, "ab3": ab3,
        "cw1": cw1, "cb1": cb1, "cw2": cw2, "cb2": cb2, "cw3": cw3, "cb3": cb3,
        "action_std": action_std,
    }


def reference_forward(states, params, *, dim_obs):
    """Pure-JAX reference mirroring the PyTorch forward (for correctness check)."""
    obs = states[:, :dim_obs]
    x = jnp.tanh(obs @ params["aw1"] + params["ab1"])
    x = jnp.tanh(x @ params["aw2"] + params["ab2"])
    action_mean = x @ params["aw3"] + params["ab3"]
    y = jnp.tanh(states @ params["cw1"] + params["cb1"])
    y = jnp.tanh(y @ params["cw2"] + params["cb2"])
    critic_value = y @ params["cw3"] + params["cb3"]
    return action_mean, critic_value


if __name__ == "__main__":
    dim_obs, dim_act = 16, 4
    key = jax.random.PRNGKey(0)
    k_params, k_states = jax.random.split(key)

    params = make_params(k_params, dim_obs, dim_act, init_std=1.0, append_time=True)
    packed_f32 = pack_params(params, dim_obs, dim_act)                             # exact
    packed_bf16 = pack_params(params, dim_obs, dim_act, compute_dtype=jnp.bfloat16)

    # Small per-env-step batch; states carry an appended time feature -> (B, dim_obs + 1).
    batch = 8
    states = jax.random.normal(k_states, (batch, dim_obs + 1), jnp.float32)

    action_mean, critic_value = actor_critic_forward(states, packed_f32, dim_act=dim_act)
    action_std = params["action_std"]  # parameter, returned as-is by forward()
    jax.block_until_ready((action_mean, action_std, critic_value))

    ref_mean, ref_value = reference_forward(states, params, dim_obs=dim_obs)
    assert action_mean.shape == (batch, dim_act)
    assert action_std.shape == (1, dim_act)
    assert critic_value.shape == (batch, 1)
    assert jnp.allclose(action_mean, ref_mean, atol=1e-5, rtol=1e-4)
    assert jnp.allclose(critic_value, ref_value, atol=1e-5, rtol=1e-4)

    # Multi-step grid + non-multiple-of-tile batch (exercises padding-aware tiling).
    big = 1003
    states_big = jax.random.normal(jax.random.PRNGKey(1), (big, dim_obs + 1), jnp.float32)
    m_big, v_big = actor_critic_forward(states_big, packed_f32, dim_act=dim_act, tile_b=256)
    rm_big, rv_big = reference_forward(states_big, params, dim_obs=dim_obs)
    assert m_big.shape == (big, dim_act) and v_big.shape == (big, 1)
    assert jnp.allclose(m_big, rm_big, atol=1e-5, rtol=1e-4)
    assert jnp.allclose(v_big, rv_big, atol=1e-5, rtol=1e-4)

    # bf16-operand path (MXU-native on v6e/v7x); bf16 precision -> loose tolerance.
    m_bf, v_bf = actor_critic_forward(states_big, packed_bf16, dim_act=dim_act)
    assert jnp.allclose(m_bf, rm_big, atol=5e-2, rtol=5e-2)
    assert jnp.allclose(v_bf, rv_big, atol=5e-2, rtol=5e-2)

    jax.block_until_ready((m_big, v_big, m_bf, v_bf))
    print("KERNEL_OK")
</pallas_src>

<mosaic_0001>
module attributes {stable_mosaic.version = 11 : i64} {
  func.func @kernel(%arg0: i32, %arg1: memref<8x17xf32, #tpu.memory_space<vmem>>, %arg2: memref<17x128xf32, #tpu.memory_space<vmem>>, %arg3: memref<1x128xf32, #tpu.memory_space<vmem>>, %arg4: memref<128x128xf32, #tpu.memory_space<vmem>>, %arg5: memref<1x128xf32, #tpu.memory_space<vmem>>, %arg6: memref<128x4xf32, #tpu.memory_space<vmem>>, %arg7: memref<1x4xf32, #tpu.memory_space<vmem>>, %arg8: memref<128x1xf32, #tpu.memory_space<vmem>>, %arg9: memref<1x1xf32, #tpu.memory_space<vmem>>, %arg10: memref<8x4xf32, #tpu.memory_space<vmem>>, %arg11: memref<8x1xf32, #tpu.memory_space<vmem>>) attributes {dimension_semantics = [#tpu.dimension_semantics<parallel>], iteration_bounds = array<i64: 1>, scalar_prefetch = 0 : i64, scratch_operands = 0 : i64, tpu.core_type = #tpu.core_type<tc>, window_params = [{transform_indices = @transform_0, window_bounds = array<i64: 8, 17>}, {pipeline_mode = #tpu.pipeline_mode<synchronous>, transform_indices = @transform_1, window_bounds = array<i64: 17, 128>}, {pipeline_mode = #tpu.pipeline_mode<synchronous>, transform_indices = @transform_2, window_bounds = array<i64: 1, 128>}, {pipeline_mode = #tpu.pipeline_mode<synchronous>, transform_indices = @transform_3, window_bounds = array<i64: 128, 128>}, {pipeline_mode = #tpu.pipeline_mode<synchronous>, transform_indices = @transform_4, window_bounds = array<i64: 1, 128>}, {pipeline_mode = #tpu.pipeline_mode<synchronous>, transform_indices = @transform_5, window_bounds = array<i64: 128, 4>}, {pipeline_mode = #tpu.pipeline_mode<synchronous>, transform_indices = @transform_6, window_bounds = array<i64: 1, 4>}, {pipeline_mode = #tpu.pipeline_mode<synchronous>, transform_indices = @transform_7, window_bounds = array<i64: 128, 1>}, {pipeline_mode = #tpu.pipeline_mode<synchronous>, transform_indices = @transform_8, window_bounds = array<i64: 1, 1>}, {transform_indices = @transform_9, window_bounds = array<i64: 8, 4>}, {transform_indices = @transform_10, window_bounds = array<i64: 8, 1>}]} {
    %c0 = arith.constant 0 : index
    %c0_0 = arith.constant 0 : index
    %0 = vector.load %arg1[%c0, %c0_0] : memref<8x17xf32, #tpu.memory_space<vmem>>, vector<8x17xf32>
    %c0_1 = arith.constant 0 : index
    %c0_2 = arith.constant 0 : index
    %1 = vector.load %arg2[%c0_1, %c0_2] : memref<17x128xf32, #tpu.memory_space<vmem>>, vector<17x128xf32>
    %cst = arith.constant dense<0.000000e+00> : vector<8x128xf32>
    %2 = tpu.matmul %0, %1, %cst {dimension_numbers = #tpu.dot_dimension_numbers<[1], [0], [0], [1], [0, 0, 1, 1], [], []>} : vector<8x17xf32>, vector<17x128xf32>, vector<8x128xf32> -> vector<8x128xf32>
    %c0_3 = arith.constant 0 : index
    %c0_4 = arith.constant 0 : index
    %3 = vector.load %arg3[%c0_3, %c0_4] : memref<1x128xf32, #tpu.memory_space<vmem>>, vector<1x128xf32>
    %4 = vector.broadcast %3 : vector<1x128xf32> to vector<8x128xf32>
    %5 = arith.addf %2, %4 : vector<8x128xf32>
    %6 = math.tanh %5 : vector<8x128xf32>
    %c0_5 = arith.constant 0 : index
    %c0_6 = arith.constant 0 : index
    %7 = vector.load %arg4[%c0_5, %c0_6] : memref<128x128xf32, #tpu.memory_space<vmem>>, vector<128x128xf32>
    %cst_7 = arith.constant dense<0.000000e+00> : vector<8x128xf32>
    %8 = tpu.matmul %6, %7, %cst_7 {dimension_numbers = #tpu.dot_dimension_numbers<[1], [0], [0], [1], [0, 0, 1, 1], [], []>} : vector<8x128xf32>, vector<128x128xf32>, vector<8x128xf32> -> vector<8x128xf32>
    %c0_8 = arith.constant 0 : index
    %c0_9 = arith.constant 0 : index
    %9 = vector.load %arg5[%c0_8, %c0_9] : memref<1x128xf32, #tpu.memory_space<vmem>>, vector<1x128xf32>
    %10 = vector.broadcast %9 : vector<1x128xf32> to vector<8x128xf32>
    %11 = arith.addf %8, %10 : vector<8x128xf32>
    %12 = math.tanh %11 : vector<8x128xf32>
    %c0_10 = arith.constant 0 : index
    %c0_11 = arith.constant 0 : index
    %13 = vector.load %arg6[%c0_10, %c0_11] : memref<128x4xf32, #tpu.memory_space<vmem>>, vector<128x4xf32>
    %cst_12 = arith.constant dense<0.000000e+00> : vector<8x4xf32>
    %14 = tpu.matmul %12, %13, %cst_12 {dimension_numbers = #tpu.dot_dimension_numbers<[1], [0], [0], [1], [0, 0, 1, 1], [], []>} : vector<8x128xf32>, vector<128x4xf32>, vector<8x4xf32> -> vector<8x4xf32>
    %c0_13 = arith.constant 0 : index
    %c0_14 = arith.constant 0 : index
    %15 = vector.load %arg7[%c0_13, %c0_14] : memref<1x4xf32, #tpu.memory_space<vmem>>, vector<1x4xf32>
    %16 = vector.broadcast %15 : vector<1x4xf32> to vector<8x4xf32>
    %17 = arith.addf %14, %16 : vector<8x4xf32>
    %c0_15 = arith.constant 0 : index
    %c0_16 = arith.constant 0 : index
    %18 = vector.load %arg8[%c0_15, %c0_16] : memref<128x1xf32, #tpu.memory_space<vmem>>, vector<128x1xf32>
    %cst_17 = arith.constant dense<0.000000e+00> : vector<8x1xf32>
    %19 = tpu.matmul %12, %18, %cst_17 {dimension_numbers = #tpu.dot_dimension_numbers<[1], [0], [0], [1], [0, 0, 1, 1], [], []>} : vector<8x128xf32>, vector<128x1xf32>, vector<8x1xf32> -> vector<8x1xf32>
    %c0_18 = arith.constant 0 : index
    %c0_19 = arith.constant 0 : index
    %20 = vector.load %arg9[%c0_18, %c0_19] : memref<1x1xf32, #tpu.memory_space<vmem>>, vector<1x1xf32>
    %21 = vector.broadcast %20 : vector<1x1xf32> to vector<8x1xf32>
    %22 = arith.addf %19, %21 : vector<8x1xf32>
    %c0_20 = arith.constant 0 : index
    %c0_21 = arith.constant 0 : index
    %23 = vector.load %arg10[%c0_20, %c0_21] : memref<8x4xf32, #tpu.memory_space<vmem>>, vector<8x4xf32>
    tpu.vector_store %arg10[%c0_20, %c0_21], %17 {strides = array<i32>} : memref<8x4xf32, #tpu.memory_space<vmem>>, vector<8x4xf32>,
    %c0_22 = arith.constant 0 : index
    %c0_23 = arith.constant 0 : index
    %24 = vector.load %arg11[%c0_22, %c0_23] : memref<8x1xf32, #tpu.memory_space<vmem>>, vector<8x1xf32>
    tpu.vector_store %arg11[%c0_22, %c0_23], %22 {strides = array<i32>} : memref<8x1xf32, #tpu.memory_space<vmem>>, vector<8x1xf32>,
    return
  }
  func.func @transform_0(%arg0: i32) -> (i32, i32) {
    %c0_i32 = arith.constant 0 : i32
    %c0_i32_0 = arith.constant 0 : i32
    return %arg0, %c0_i32 : i32, i32
  }
  func.func @transform_1(%arg0: i32) -> (i32, i32) {
    %c0_i32 = arith.constant 0 : i32
    %c0_i32_0 = arith.constant 0 : i32
    %c0_i32_1 = arith.constant 0 : i32
    return %c0_i32, %c0_i32_0 : i32, i32
  }
  func.func @transform_2(%arg0: i32) -> (i32, i32) {
    %c0_i32 = arith.constant 0 : i32
    %c0_i32_0 = arith.constant 0 : i32
    %c0_i32_1 = arith.constant 0 : i32
    return %c0_i32, %c0_i32_0 : i32, i32
  }
  func.func @transform_3(%arg0: i32) -> (i32, i32) {
    %c0_i32 = arith.constant 0 : i32
    %c0_i32_0 = arith.constant 0 : i32
    %c0_i32_1 = arith.constant 0 : i32
    return %c0_i32, %c0_i32_0 : i32, i32
  }
  func.func @transform_4(%arg0: i32) -> (i32, i32) {
    %c0_i32 = arith.constant 0 : i32
    %c0_i32_0 = arith.constant 0 : i32
    %c0_i32_1 = arith.constant 0 : i32
    return %c0_i32, %c0_i32_0 : i32, i32
  }
  func.func @transform_5(%arg0: i32) -> (i32, i32) {
    %c0_i32 = arith.constant 0 : i32
    %c0_i32_0 = arith.constant 0 : i32
    %c0_i32_1 = arith.constant 0 : i32
    return %c0_i32, %c0_i32_0 : i32, i32
  }
  func.func @transform_6(%arg0: i32) -> (i32, i32) {
    %c0_i32 = arith.constant 0 : i32
    %c0_i32_0 = arith.constant 0 : i32
    %c0_i32_1 = arith.constant 0 : i32
    return %c0_i32, %c0_i32_0 : i32, i32
  }
  func.func @transform_7(%arg0: i32) -> (i32, i32) {
    %c0_i32 = arith.constant 0 : i32
    %c0_i32_0 = arith.constant 0 : i32
    %c0_i32_1 = arith.constant 0 : i32
    return %c0_i32, %c0_i32_0 : i32, i32
  }
  func.func @transform_8(%arg0: i32) -> (i32, i32) {
    %c0_i32 = arith.constant 0 : i32
    %c0_i32_0 = arith.constant 0 : i32
    %c0_i32_1 = arith.constant 0 : i32
    return %c0_i32, %c0_i32_0 : i32, i32
  }
  func.func @transform_9(%arg0: i32) -> (i32, i32) {
    %c0_i32 = arith.constant 0 : i32
    %c0_i32_0 = arith.constant 0 : i32
    return %arg0, %c0_i32 : i32, i32
  }
  func.func @transform_10(%arg0: i32) -> (i32, i32) {
    %c0_i32 = arith.constant 0 : i32
    %c0_i32_0 = arith.constant 0 : i32
    return %arg0, %c0_i32 : i32, i32
  }
}

</mosaic_0001>

<llo_original>
// kernel: tpu_custom_call.1
$region0: #{tpu_custom_call.1}
  #allocation0 [shape = 'u32[]', space=smem, size = 0x4, offset = 0x4, fixed_abs, tag = 'smem constant byte address 0x4 - core index']
  #allocation1 [shape = 'u32[72,128]{1,0:T(1,128)}', space=vmem, size = 0x9000, scoped, tag = 'internal scratch']
  #allocation2 [shape = 'f32[1,1]{1,0:T(1,128)S(1)}', space=vmem, size = 0x200, scoped, tag = 'scoped memory for tpu_custom_call.1']
  %s0 = inlined_call_operand.vmem [shape: f32[8,17], index: 0, kind: input, shape index: {}]
  %s1 = inlined_call_operand.vmem [shape: f32[17,128], index: 1, kind: input, shape index: {}]
  %s2 = inlined_call_operand.vmem [shape: f32[1,128], index: 2, kind: input, shape index: {}]
  %s3 = inlined_call_operand.vmem [shape: f32[128,128], index: 3, kind: input, shape index: {}]
  %s4 = inlined_call_operand.vmem [shape: f32[1,128], index: 4, kind: input, shape index: {}]
  %s5 = inlined_call_operand.vmem [shape: f32[128,4], index: 5, kind: input, shape index: {}]
  %s6 = inlined_call_operand.vmem [shape: f32[1,4], index: 6, kind: input, shape index: {}]
  %s7 = inlined_call_operand.vmem [shape: f32[128,1], index: 7, kind: input, shape index: {}]
  %s8 = inlined_call_operand.<no memory space> [shape: f32[1,1], index: 8, kind: input, shape index: {}]
  %s9 = inlined_call_operand.vmem [shape: f32[8,4], index: 9, kind: output, shape index: {0}]
  %s10 = inlined_call_operand.vmem [shape: f32[8,1], index: 10, kind: output, shape index: {1}]
  %11 = xla_tuple %s9, %s10
  %s12 = sld [smem:[#allocation0]]
  $region54: #{tpu_custom_call.1} parent=0
    _
  %s14 = ssub.s32 1, %s12
  %s15 = scalar_select 0, %s14, %s12
  %v16 = vstv %s8
  %17 = vst [vmem:[#allocation2] sm:$0x1] %v16
  // Predicated region
  $region2: #{tpu_custom_call.1} parent=0 // pred_check
    _
  $region3: #{tpu_custom_call.1} parent=0 // pred_check_branch
    %19 = sbr.rel (0) target = $region5
  $region4: #{tpu_custom_call.1} parent=0 // pred_region
    _
  $region5: #{tpu_custom_call.1} parent=0 // pred_fallthru
    _
  // Predicated region
  $region6: #{tpu_custom_call.1} parent=0 // pred_check
    _
  $region7: #{tpu_custom_call.1} parent=0 // pred_check_branch
    %21 = sbr.rel (0) target = $region9
  $region8: #{tpu_custom_call.1} parent=0 // pred_region
    _
  $region9: #{tpu_custom_call.1} parent=0 // pred_fallthru
    _
  // Predicated region
  $region10: #{tpu_custom_call.1} parent=0 // pred_check
    _
  $region11: #{tpu_custom_call.1} parent=0 // pred_check_branch
    %23 = sbr.rel (0) target = $region13
  $region12: #{tpu_custom_call.1} parent=0 // pred_region
    _
  $region13: #{tpu_custom_call.1} parent=0 // pred_fallthru
    _
  // Predicated region
  $region14: #{tpu_custom_call.1} parent=0 // pred_check
    _
  $region15: #{tpu_custom_call.1} parent=0 // pred_check_branch
    %25 = sbr.rel (0) target = $region17
  $region16: #{tpu_custom_call.1} parent=0 // pred_region
    _
  $region17: #{tpu_custom_call.1} parent=0 // pred_fallthru
    _
  // Predicated region
  $region18: #{tpu_custom_call.1} parent=0 // pred_check
    _
  $region19: #{tpu_custom_call.1} parent=0 // pred_check_branch
    %27 = sbr.rel (0) target = $region21
  $region20: #{tpu_custom_call.1} parent=0 // pred_region
    _
  $region21: #{tpu_custom_call.1} parent=0 // pred_fallthru
    _
  // Predicated region
  $region22: #{tpu_custom_call.1} parent=0 // pred_check
    _
  $region23: #{tpu_custom_call.1} parent=0 // pred_check_branch
    %29 = sbr.rel (0) target = $region25
  $region24: #{tpu_custom_call.1} parent=0 // pred_region
    _
  $region25: #{tpu_custom_call.1} parent=0 // pred_fallthru
    _
  // Predicated region
  $region26: #{tpu_custom_call.1} parent=0 // pred_check
    _
  $region27: #{tpu_custom_call.1} parent=0 // pred_check_branch
    %31 = sbr.rel (0) target = $region29
  $region28: #{tpu_custom_call.1} parent=0 // pred_region
    _
  $region29: #{tpu_custom_call.1} parent=0 // pred_fallthru
    _
  // Predicated region
  $region30: #{tpu_custom_call.1} parent=0 // pred_check
    _
  $region31: #{tpu_custom_call.1} parent=0 // pred_check_branch
    %33 = sbr.rel (0) target = $region33
  $region32: #{tpu_custom_call.1} parent=0 // pred_region
    _
  $region33: #{tpu_custom_call.1} parent=0 // pred_fallthru
    _
  // Predicated region
  $region34: #{tpu_custom_call.1} parent=0 // pred_check
    _
  $region35: #{tpu_custom_call.1} parent=0 // pred_check_branch
    %35 = sbr.rel (0) target = $region37
  $region36: #{tpu_custom_call.1} parent=0 // pred_region
    _
  $region37: #{tpu_custom_call.1} parent=0 // pred_fallthru
    _
  %v36 = vld [vmem:[%s0] sm:$0xff]
  %v37 = vld [vmem:[%s1] sm:$0xff]
  %v38 = vld [vmem:[%s1 + $0x8] sm:$0xff]
  %v39 = vld [vmem:[%s1 + $0x10] sm:$0x1]
  %v40 = vld [vmem:[%s2] sm:$0x1]
  %v42 = vperm.slane %v40, 0
  %vm44 = vcmask 138240
  %v46 = vsel %vm44, %v36, 0
  %vm48 = vcmask 1040384
  %v50 = vsel %vm48, %v39, 0
  %52 = vmatpush.msra.mxu0 0.0
  %53 = vmatpush.msra.mxu0 0.0
  %54 = vmatpush.msra.mxu0 0.0
  %55 = vmatpush.msra.mxu0 0.0
  %56 = vmatpush.msra.mxu0 0.0
  %57 = vmatpush.msra.mxu0 0.0
  %58 = vmatpush.msra.mxu0 0.0
  %59 = vmatpush.msra.mxu0 0.0
  %60 = vmatpush.msra.mxu0 0.0
  %61 = vmatpush.msra.mxu0 0.0
  %62 = vmatpush.msra.mxu0 0.0
  %63 = vmatpush.msra.mxu0 0.0
  %64 = vmatpush.msra.mxu0 0.0
  %65 = vmatpush.msra.mxu0 %v50
  %66 = vmatpush.msra.mxu0 %v38
  %67 = vmatpush.msra.mxu0 %v37
  %68 = vmatmul.f32.gmra.mxu0 %v46
  %v69 = vpop.f32.mrf.mxu0
  %v70 = vadd.f32 %v42, %v69
  %71 = vdwg.mxu0
  %v72 = vtanh.pop %v70
  %v73 = vld [vmem:[%s3] sm:$0xff]
  %v74 = vld [vmem:[%s3 + $0x8] sm:$0xff]
  %v75 = vld [vmem:[%s3 + $0x10] sm:$0xff]
  %v76 = vld [vmem:[%s3 + $0x18] sm:$0xff]
  %v77 = vld [vmem:[%s3 + $0x20] sm:$0xff]
  %v78 = vld [vmem:[%s3 + $0x28] sm:$0xff]
  %v79 = vld [vmem:[%s3 + $0x30] sm:$0xff]
  %v80 = vld [vmem:[%s3 + $0x38] sm:$0xff]
  %v81 = vld [vmem:[%s3 + $0x40] sm:$0xff]
  %v82 = vld [vmem:[%s3 + $0x48] sm:$0xff]
  %v83 = vld [vmem:[%s3 + $0x50] sm:$0xff]
  %v84 = vld [vmem:[%s3 + $0x58] sm:$0xff]
  %v85 = vld [vmem:[%s3 + $0x60] sm:$0xff]
  %v86 = vld [vmem:[%s3 + $0x68] sm:$0xff]
  %v87 = vld [vmem:[%s3 + $0x70] sm:$0xff]
  %v88 = vld [vmem:[%s3 + $0x78] sm:$0xff]
  %v89 = vld [vmem:[%s4] sm:$0x1]
  %v91 = vperm.slane %v89, 0
  %93 = vmatpush.msra.mxu0 %v88
  %94 = vmatpush.msra.mxu0 %v87
  %95 = vmatpush.msra.mxu0 %v86
  %96 = vmatpush.msra.mxu0 %v85
  %97 = vmatpush.msra.mxu0 %v84
  %98 = vmatpush.msra.mxu0 %v83
  %99 = vmatpush.msra.mxu0 %v82
  %100 = vmatpush.msra.mxu0 %v81
  %101 = vmatpush.msra.mxu0 %v80
  %102 = vmatpush.msra.mxu0 %v79
  %103 = vmatpush.msra.mxu0 %v78
  %104 = vmatpush.msra.mxu0 %v77
  %105 = vmatpush.msra.mxu0 %v76
  %106 = vmatpush.msra.mxu0 %v75
  %107 = vmatpush.msra.mxu0 %v74
  %108 = vmatpush.msra.mxu0 %v73
  %109 = vmatmul.f32.gmra.mxu0 %v72
  %v110 = vpop.f32.mrf.mxu0
  %v111 = vadd.f32 %v91, %v110
  %112 = vdwg.mxu0
  %v113 = vtanh.pop %v111
  %v114 = vld [vmem:[%s5] sm:$0xff]
  %v115 = vld [vmem:[%s5 + $0x8] sm:$0xff]
  %v116 = vld [vmem:[%s5 + $0x10] sm:$0xff]
  %v117 = vld [vmem:[%s5 + $0x18] sm:$0xff]
  %v118 = vld [vmem:[%s5 + $0x20] sm:$0xff]
  %v119 = vld [vmem:[%s5 + $0x28] sm:$0xff]
  %v120 = vld [vmem:[%s5 + $0x30] sm:$0xff]
  %v121 = vld [vmem:[%s5 + $0x38] sm:$0xff]
  %v122 = vld [vmem:[%s5 + $0x40] sm:$0xff]
  %v123 = vld [vmem:[%s5 + $0x48] sm:$0xff]
  %v124 = vld [vmem:[%s5 + $0x50] sm:$0xff]
  %v125 = vld [vmem:[%s5 + $0x58] sm:$0xff]
  %v126 = vld [vmem:[%s5 + $0x60] sm:$0xff]
  %v127 = vld [vmem:[%s5 + $0x68] sm:$0xff]
  %v128 = vld [vmem:[%s5 + $0x70] sm:$0xff]
  %v129 = vld [vmem:[%s5 + $0x78] sm:$0xff]
  %v130 = vld [vmem:[%s6] sm:$0x1]
  %v132 = vperm.slane %v130, 0
  %134 = vmatpush.msra.mxu0 %v129
  %135 = vmatpush.msra.mxu0 %v128
  %136 = vmatpush.msra.mxu0 %v127
  %137 = vmatpush.msra.mxu0 %v126
  %138 = vmatpush.msra.mxu0 %v125
  %139 = vmatpush.msra.mxu0 %v124
  %140 = vmatpush.msra.mxu0 %v123
  %141 = vmatpush.msra.mxu0 %v122
  %142 = vmatpush.msra.mxu0 %v121
  %143 = vmatpush.msra.mxu0 %v120
  %144 = vmatpush.msra.mxu0 %v119
  %145 = vmatpush.msra.mxu0 %v118
  %146 = vmatpush.msra.mxu0 %v117
  %147 = vmatpush.msra.mxu0 %v116
  %148 = vmatpush.msra.mxu0 %v115
  %149 = vmatpush.msra.mxu0 %v114
  %150 = vmatmul.f32.gmra.mxu0 %v113
  %v151 = vpop.f32.mrf.mxu0
  %v152 = vadd.f32 %v132, %v151
  %153 = vdwg.mxu0
  %v154 = vld [vmem:[%s7] sm:$0xff]
  %v155 = vld [vmem:[%s7 + $0x8] sm:$0xff]
  %v156 = vld [vmem:[%s7 + $0x10] sm:$0xff]
  %v157 = vld [vmem:[%s7 + $0x18] sm:$0xff]
  %v158 = vld [vmem:[%s7 + $0x20] sm:$0xff]
  %v159 = vld [vmem:[%s7 + $0x28] sm:$0xff]
  %v160 = vld [vmem:[%s7 + $0x30] sm:$0xff]
  %v161 = vld [vmem:[%s7 + $0x38] sm:$0xff]
  %v162 = vld [vmem:[%s7 + $0x40] sm:$0xff]
  %v163 = vld [vmem:[%s7 + $0x48] sm:$0xff]
  %v164 = vld [vmem:[%s7 + $0x50] sm:$0xff]
  %v165 = vld [vmem:[%s7 + $0x58] sm:$0xff]
  %v166 = vld [vmem:[%s7 + $0x60] sm:$0xff]
  %v167 = vld [vmem:[%s7 + $0x68] sm:$0xff]
  %v168 = vld [vmem:[%s7 + $0x70] sm:$0xff]
  %v169 = vld [vmem:[%s7 + $0x78] sm:$0xff]
  %v170 = vld [vmem:[#allocation2] sm:$0x1]
  %v172 = vperm.slane %v170, 0
  %174 = vmatpush.msra.mxu0 %v169
  %175 = vmatpush.msra.mxu0 %v168
  %176 = vmatpush.msra.mxu0 %v167
  %177 = vmatpush.msra.mxu0 %v166
  %178 = vmatpush.msra.mxu0 %v165
  %179 = vmatpush.msra.mxu0 %v164
  %180 = vmatpush.msra.mxu0 %v163
  %181 = vmatpush.msra.mxu0 %v162
  %182 = vmatpush.msra.mxu0 %v161
  %183 = vmatpush.msra.mxu0 %v160
  %184 = vmatpush.msra.mxu0 %v159
  %185 = vmatpush.msra.mxu0 %v158
  %186 = vmatpush.msra.mxu0 %v157
  %187 = vmatpush.msra.mxu0 %v156
  %188 = vmatpush.msra.mxu0 %v155
  %189 = vmatpush.msra.mxu0 %v154
  %190 = vmatmul.f32.gmra.mxu0 %v113
  %v191 = vpop.f32.mrf.mxu0
  %v192 = vadd.f32 %v172, %v191
  %193 = vdwg.mxu0
  %vm194 = vcmask 31744
  %195 = vst.msk [vmem:[%s9] sm:$0xff] %vm194, %v152
  %vm196 = vcmask 7168
  %197 = vst.msk [vmem:[%s10] sm:$0xff] %vm196, %v192
  // Predicated region
  $region38: #{tpu_custom_call.1} parent=0 // pred_check
    _
  $region39: #{tpu_custom_call.1} parent=0 // pred_check_branch
    %199 = sbr.rel (0) target = $region41
  $region40: #{tpu_custom_call.1} parent=0 // pred_region
    _
  $region41: #{tpu_custom_call.1} parent=0 // pred_fallthru
    _
  // Predicated region
  $region42: #{tpu_custom_call.1} parent=0 // pred_check
    _
  $region43: #{tpu_custom_call.1} parent=0 // pred_check_branch
    %201 = sbr.rel (0) target = $region45
  $region44: #{tpu_custom_call.1} parent=0 // pred_region
    _
  $region45: #{tpu_custom_call.1} parent=0 // pred_fallthru
    _
  // Predicated region
  $region46: #{tpu_custom_call.1} parent=0 // pred_check
    _
  $region47: #{tpu_custom_call.1} parent=0 // pred_check_branch
    %203 = sbr.rel (0) target = $region49
  $region48: #{tpu_custom_call.1} parent=0 // pred_region
    _
  $region49: #{tpu_custom_call.1} parent=0 // pred_fallthru
    _
  // Predicated region
  $region50: #{tpu_custom_call.1} parent=0 // pred_check
    _
  $region51: #{tpu_custom_call.1} parent=0 // pred_check_branch
    %205 = sbr.rel (0) target = $region53
  $region52: #{tpu_custom_call.1} parent=0 // pred_region
    _
  $region53: #{tpu_custom_call.1} parent=0 // pred_fallthru
    _

</llo_original>
